<compile_context>
chip_gen: v5e
topology: v5e:2x2
jax: 0.10.0
libtpu: 0.0.40
codegen_flags: <defaults>
</compile_context>

<pallas_src>
import functools

import jax
import jax.numpy as jnp
from jax.experimental import pallas as pl
from jax.experimental.pallas import tpu as pltpu


def _dice_kernel(x_ref, t_ref, inter_ref, union_ref, *,
                 n_valid, chunk, n_chunks, ragged):
    j = pl.program_id(1)  # reduction-axis position (innermost, "arbitrary")

    @pl.when(j == 0)
    def _():
        inter_ref[...] = jnp.zeros_like(inter_ref)
        union_ref[...] = jnp.zeros_like(union_ref)

    x = x_ref[...].astype(jnp.float32)
    t = t_ref[...].astype(jnp.float32)
    # sigmoid(x) == 0.5 * tanh(0.5 * x) + 0.5  -> single EUP op per element.
    p = 0.5 * jnp.tanh(0.5 * x) + 0.5

    def _accumulate(pv, tv):
        inter_ref[...] += jnp.sum(pv * tv, axis=1, keepdims=True)
        union_ref[...] += jnp.sum(pv + tv, axis=1, keepdims=True)

    if ragged:  # static flag: only traced when chunk does not divide the row length
        @pl.when(j == n_chunks - 1)
        def _():
            # Scalar remaining-valid count for the tail block; OOB lanes hold
            # unspecified data (possibly NaN after tanh) but jnp.where discards
            # them for BOTH operands before any arithmetic that could leak.
            rem = n_valid - j * chunk
            col = jax.lax.broadcasted_iota(jnp.int32, p.shape, 1)
            valid = col < rem
            _accumulate(jnp.where(valid, p, 0.0), jnp.where(valid, t, 0.0))

        @pl.when(j != n_chunks - 1)
        def _():
            _accumulate(p, t)
    else:
        _accumulate(p, t)


def dice_loss(logits, targets, smooth=1.0, target_tile_bytes=2 * 1024 * 1024):
    """Pallas implementation of DiceLoss.forward(logits, targets) -> scalar f32."""
    B = logits.shape[0]
    N = 1
    for d in logits.shape[1:]:
        N *= d

    x_isize = jnp.dtype(logits.dtype).itemsize
    t_isize = jnp.dtype(targets.dtype).itemsize
    # Native packed sublane count: 8 (f32), 16 (bf16/f16), 32 (int8/fp8).
    native_rows = 8 * max(1, 4 // min(x_isize, t_isize))

    # Sublane-dense fold: [B, N] -> [B*R, N/R] (free row-major reshape), so
    # small batches still fill packed vregs. Keep at least 128 lanes per row.
    R = 1
    while (B * R) < native_rows and (N % (2 * R) == 0) and (N // (2 * R)) >= 128:
        R *= 2
    ROWS = B * R
    Nf = N // R

    lf = logits.reshape(ROWS, Nf)   # native dtype, no cast / no pad in HBM
    tf = targets.reshape(ROWS, Nf)

    # Leading "parallel" axis over row blocks (2-TC split on v7x) only when the
    # input is large enough that the extra grid step is negligible, and the
    # per-shard row count stays block-shape legal for packed dtypes.
    total_bytes = B * N * (x_isize + t_isize)
    row_shards = 2 if (total_bytes >= (4 << 20) and ROWS % (2 * native_rows) == 0) else 1
    rps = ROWS // row_shards

    # ~target_tile_bytes per input block regardless of dtype; multiple of 128 lanes.
    chunk_desired = max(512, ((target_tile_bytes // x_isize) // max(rps, 1)) // 128 * 128)
    if Nf <= chunk_desired:
        chunk = Nf            # single block == full row -> no masking needed
    else:
        chunk = chunk_desired
    n_chunks = pl.cdiv(Nf, chunk)
    ragged = (Nf % chunk) != 0

    # Explicit VMEM budget: 2 inputs x 2 pipeline buffers x tile, plus slack.
    tile_bytes = rps * chunk * (x_isize + t_isize)
    vmem_limit = int(min(64 << 20, max(16 << 20, 2 * tile_bytes + (2 << 20))))

    kernel = functools.partial(_dice_kernel, n_valid=Nf, chunk=chunk,
                               n_chunks=n_chunks, ragged=ragged)

    out_shape = [jax.ShapeDtypeStruct((ROWS, 1), jnp.float32)] * 2
    out_spec = pl.BlockSpec((rps, 1), lambda s, j: (s, 0))

    inter, union = pl.pallas_call(
        kernel,
        out_shape=out_shape,
        grid_spec=pltpu.PrefetchScalarGridSpec(
            num_scalar_prefetch=0,
            grid=(row_shards, n_chunks),          # reduction axis last
            in_specs=[
                pl.BlockSpec((rps, chunk), lambda s, j: (s, j)),
                pl.BlockSpec((rps, chunk), lambda s, j: (s, j)),
            ],
            out_specs=[out_spec, out_spec],
        ),
        compiler_params=pltpu.CompilerParams(
            dimension_semantics=("parallel", "arbitrary"),
            vmem_limit_bytes=vmem_limit),
    )(lf, tf)

    # Tiny epilogue in plain JAX: fold the R sub-rows back per sample.
    inter = inter.reshape(B, R).sum(axis=1)
    union = union.reshape(B, R).sum(axis=1)
    dice = (2.0 * inter + smooth) / (union + smooth)
    return (1.0 - jnp.mean(dice)).astype(jnp.float32)


def dice_loss_ref(logits, targets, smooth=1.0):
    # Pure-JAX reference mirroring the PyTorch module.
    B = logits.shape[0]
    probs = jax.nn.sigmoid(logits.astype(jnp.float32)).reshape(B, -1)
    t = targets.astype(jnp.float32).reshape(B, -1)
    intersection = jnp.sum(probs * t, axis=1)
    union = jnp.sum(probs, axis=1) + jnp.sum(t, axis=1)
    dice = (2.0 * intersection + smooth) / (union + smooth)
    return 1.0 - jnp.mean(dice)


if __name__ == "__main__":
    key = jax.random.PRNGKey(0)
    k1, k2, k3, k4 = jax.random.split(key, 4)

    # Primary case: small NCHW shapes matching the module's typical use.
    # Collapses to a single (1, 1) grid step: no shard, no chunking, no mask.
    B, C, H, W = 2, 4, 16, 16
    logits = jax.random.normal(k1, (B, C, H, W), dtype=jnp.float32)
    targets = (jax.random.uniform(k2, (B, C, H, W)) > 0.5).astype(jnp.float32)

    loss = dice_loss(logits, targets, smooth=1.0)
    jax.block_until_ready(loss)
    ref = dice_loss_ref(logits, targets, smooth=1.0)
    assert jnp.allclose(loss, ref, atol=1e-5, rtol=1e-5), (loss, ref)

    # Secondary case: bf16 inputs + forced tiny tile to exercise the
    # multi-chunk path with the tail-only ragged mask.
    B2, C2, H2, W2 = 2, 4, 36, 36
    logits2 = jax.random.normal(k3, (B2, C2, H2, W2), dtype=jnp.bfloat16)
    targets2 = (jax.random.uniform(k4, (B2, C2, H2, W2)) > 0.5).astype(jnp.bfloat16)

    loss2 = dice_loss(logits2, targets2, smooth=1.0, target_tile_bytes=2048)
    jax.block_until_ready(loss2)
    ref2 = dice_loss_ref(logits2, targets2, smooth=1.0)
    assert jnp.allclose(loss2, ref2, atol=2e-5, rtol=2e-5), (loss2, ref2)

    print("KERNEL_OK")
</pallas_src>

<mosaic_0001>
module attributes {stable_mosaic.version = 11 : i64} {
  func.func @_dice_kernel(%arg0: i32, %arg1: i32, %arg2: memref<8x256xf32, #tpu.memory_space<vmem>>, %arg3: memref<8x256xf32, #tpu.memory_space<vmem>>, %arg4: memref<8x1xf32, #tpu.memory_space<vmem>>, %arg5: memref<8x1xf32, #tpu.memory_space<vmem>>) attributes {dimension_semantics = [#tpu.dimension_semantics<parallel>, #tpu.dimension_semantics<arbitrary>], iteration_bounds = array<i64: 1, 1>, scalar_prefetch = 0 : i64, scratch_operands = 0 : i64, tpu.core_type = #tpu.core_type<tc>, window_params = [{transform_indices = @transform_0, window_bounds = array<i64: 8, 256>}, {transform_indices = @transform_1, window_bounds = array<i64: 8, 256>}, {transform_indices = @transform_2, window_bounds = array<i64: 8, 1>}, {transform_indices = @transform_3, window_bounds = array<i64: 8, 1>}]} {
    %c0_i32 = arith.constant 0 : i32
    %0 = arith.cmpi eq, %arg1, %c0_i32 : i32
    %1 = arith.extui %0 : i1 to i32
    %c0_i32_0 = arith.constant 0 : i32
    %2 = arith.cmpi ne, %1, %c0_i32_0 : i32
    scf.if %2 {
      %cst_16 = arith.constant 0.000000e+00 : f32
      %24 = vector.broadcast %cst_16 : f32 to vector<8x1xf32>
      %c0_17 = arith.constant 0 : index
      %c0_18 = arith.constant 0 : index
      %25 = vector.load %arg4[%c0_17, %c0_18] : memref<8x1xf32, #tpu.memory_space<vmem>>, vector<8x1xf32>
      tpu.vector_store %arg4[%c0_17, %c0_18], %24 {strides = array<i32>} : memref<8x1xf32, #tpu.memory_space<vmem>>, vector<8x1xf32>,
      %cst_19 = arith.constant 0.000000e+00 : f32
      %26 = vector.broadcast %cst_19 : f32 to vector<8x1xf32>
      %c0_20 = arith.constant 0 : index
      %c0_21 = arith.constant 0 : index
      %27 = vector.load %arg5[%c0_20, %c0_21] : memref<8x1xf32, #tpu.memory_space<vmem>>, vector<8x1xf32>
      tpu.vector_store %arg5[%c0_20, %c0_21], %26 {strides = array<i32>} : memref<8x1xf32, #tpu.memory_space<vmem>>, vector<8x1xf32>,
    } else {
    }
    %c0 = arith.constant 0 : index
    %c0_1 = arith.constant 0 : index
    %3 = vector.load %arg2[%c0, %c0_1] : memref<8x256xf32, #tpu.memory_space<vmem>>, vector<8x256xf32>
    %c0_2 = arith.constant 0 : index
    %c0_3 = arith.constant 0 : index
    %4 = vector.load %arg3[%c0_2, %c0_3] : memref<8x256xf32, #tpu.memory_space<vmem>>, vector<8x256xf32>
    %cst = arith.constant 5.000000e-01 : f32
    %5 = vector.broadcast %cst : f32 to vector<8x256xf32>
    %6 = arith.mulf %5, %3 : vector<8x256xf32>
    %7 = math.tanh %6 : vector<8x256xf32>
    %cst_4 = arith.constant 5.000000e-01 : f32
    %8 = vector.broadcast %cst_4 : f32 to vector<8x256xf32>
    %9 = arith.mulf %8, %7 : vector<8x256xf32>
    %cst_5 = arith.constant 5.000000e-01 : f32
    %10 = vector.broadcast %cst_5 : f32 to vector<8x256xf32>
    %11 = arith.addf %9, %10 : vector<8x256xf32>
    %c0_6 = arith.constant 0 : index
    %c0_7 = arith.constant 0 : index
    %12 = vector.load %arg4[%c0_6, %c0_7] : memref<8x1xf32, #tpu.memory_space<vmem>>, vector<8x1xf32>
    %13 = arith.mulf %11, %4 : vector<8x256xf32>
    %cst_8 = arith.constant dense<0.000000e+00> : vector<8xf32>
    %14 = vector.multi_reduction <add>, %13, %cst_8 [1] : vector<8x256xf32> to vector<8xf32>
    %15 = vector.shape_cast %14 : vector<8xf32> to vector<8x1xf32>
    %16 = arith.addf %12, %15 : vector<8x1xf32>
    %c0_9 = arith.constant 0 : index
    %c0_10 = arith.constant 0 : index
    %17 = vector.load %arg4[%c0_9, %c0_10] : memref<8x1xf32, #tpu.memory_space<vmem>>, vector<8x1xf32>
    tpu.vector_store %arg4[%c0_9, %c0_10], %16 {strides = array<i32>} : memref<8x1xf32, #tpu.memory_space<vmem>>, vector<8x1xf32>,
    %c0_11 = arith.constant 0 : index
    %c0_12 = arith.constant 0 : index
    %18 = vector.load %arg5[%c0_11, %c0_12] : memref<8x1xf32, #tpu.memory_space<vmem>>, vector<8x1xf32>
    %19 = arith.addf %11, %4 : vector<8x256xf32>
    %cst_13 = arith.constant dense<0.000000e+00> : vector<8xf32>
    %20 = vector.multi_reduction <add>, %19, %cst_13 [1] : vector<8x256xf32> to vector<8xf32>
    %21 = vector.shape_cast %20 : vector<8xf32> to vector<8x1xf32>
    %22 = arith.addf %18, %21 : vector<8x1xf32>
    %c0_14 = arith.constant 0 : index
    %c0_15 = arith.constant 0 : index
    %23 = vector.load %arg5[%c0_14, %c0_15] : memref<8x1xf32, #tpu.memory_space<vmem>>, vector<8x1xf32>
    tpu.vector_store %arg5[%c0_14, %c0_15], %22 {strides = array<i32>} : memref<8x1xf32, #tpu.memory_space<vmem>>, vector<8x1xf32>,
    return
  }
  func.func @transform_0(%arg0: i32, %arg1: i32) -> (i32, i32) {
    %c0_i32 = arith.constant 0 : i32
    return %arg0, %arg1 : i32, i32
  }
  func.func @transform_1(%arg0: i32, %arg1: i32) -> (i32, i32) {
    %c0_i32 = arith.constant 0 : i32
    return %arg0, %arg1 : i32, i32
  }
  func.func @transform_2(%arg0: i32, %arg1: i32) -> (i32, i32) {
    %c0_i32 = arith.constant 0 : i32
    %c0_i32_0 = arith.constant 0 : i32
    return %arg0, %c0_i32 : i32, i32
  }
  func.func @transform_3(%arg0: i32, %arg1: i32) -> (i32, i32) {
    %c0_i32 = arith.constant 0 : i32
    %c0_i32_0 = arith.constant 0 : i32
    return %arg0, %c0_i32 : i32, i32
  }
}

</mosaic_0001>

<llo_original>
// kernel: tpu_custom_call.1
$region0: #{tpu_custom_call.1}
  #allocation0 [shape = 'u32[]', space=smem, size = 0x4, offset = 0x4, fixed_abs, tag = 'smem constant byte address 0x4 - core index']
  #allocation1 [shape = 'u32[72,128]{1,0:T(1,128)}', space=vmem, size = 0x9000, scoped, tag = 'internal scratch']
  %s0 = inlined_call_operand.hbm [shape: f32[8,256], index: 0, kind: input, shape index: {}]
  %s1 = inlined_call_operand.hbm [shape: f32[8,256], index: 1, kind: input, shape index: {}]
  %s2 = inlined_call_operand.vmem [shape: f32[8,1], index: 2, kind: output, shape index: {0}]
  %s3 = inlined_call_operand.vmem [shape: f32[8,1], index: 3, kind: output, shape index: {1}]
  %4 = xla_tuple %s2, %s3
  %s5 = sld [smem:[#allocation0]]
  $region38: #{tpu_custom_call.1} parent=0
    _
  %s7 = ssub.s32 1, %s5
  %s8 = scalar_select 0, %s7, %s5
  $region1: #{tpu_custom_call.1} parent=0
    #allocation2 [shape = 'u8[8192]{0}', space=vmem, size = 0x2000, scoped, tag = 'input window, operand 0, single buffered']
    #allocation3 [shape = 's32[1]{0}', space=sflag, size = 0x4, scoped, tag = 'scoped memory for tpu_custom_call.1']
    #allocation4 [shape = 'u8[8192]{0}', space=vmem, size = 0x2000, scoped, tag = 'input window, operand 1, single buffered']
    #allocation5 [shape = 's32[1]{0}', space=sflag, size = 0x4, scoped, tag = 'scoped memory for tpu_custom_call.1']
    %9 = vsyncpa [#allocation3], 0
    %10 = vsyncpa [#allocation5], 0
    // Predicated region
    $region2: #{tpu_custom_call.1} parent=1 // pred_check
      _
    $region3: #{tpu_custom_call.1} parent=1 // pred_check_branch
      %12 = sbr.rel (0) target = $region5
    $region4: #{tpu_custom_call.1} parent=1 // pred_region
      %14 = vsyncadd [#allocation3], 0
      %s16 = sshll.u32 %s0, 4
      %s17 = int_to_ptr.hbm [resolvable:$true] %s16
      %s18 = sshll.u32 [#allocation2], 4
      %s19 = int_to_ptr.vmem [resolvable:$true] %s18
      %21 = dma.hbm_to_vmem [thread:$0]  %s17, 256, %s19, [#allocation3]
    $region5: #{tpu_custom_call.1} parent=1 // pred_fallthru
      _
    // Predicated region
    $region6: #{tpu_custom_call.1} parent=1 // pred_check
      _
    $region7: #{tpu_custom_call.1} parent=1 // pred_check_branch
      %23 = sbr.rel (0) target = $region9
    $region8: #{tpu_custom_call.1} parent=1 // pred_region
      %25 = vsyncadd [#allocation5], 0
      %s27 = sshll.u32 %s1, 4
      %s28 = int_to_ptr.hbm [resolvable:$true] %s27
      %s29 = sshll.u32 [#allocation4], 4
      %s30 = int_to_ptr.vmem [resolvable:$true] %s29
      %32 = dma.hbm_to_vmem [thread:$0]  %s28, 256, %s30, [#allocation5]
    $region9: #{tpu_custom_call.1} parent=1 // pred_fallthru
      _
    // Predicated region
    $region10: #{tpu_custom_call.1} parent=1 // pred_check
      _
    $region11: #{tpu_custom_call.1} parent=1 // pred_check_branch
      %34 = sbr.rel (0) target = $region13
    $region12: #{tpu_custom_call.1} parent=1 // pred_region
      %36 = dma.done [#allocation3], 256
    $region13: #{tpu_custom_call.1} parent=1 // pred_fallthru
      _
    // Predicated region
    $region14: #{tpu_custom_call.1} parent=1 // pred_check
      _
    $region15: #{tpu_custom_call.1} parent=1 // pred_check_branch
      %38 = sbr.rel (0) target = $region17
    $region16: #{tpu_custom_call.1} parent=1 // pred_region
      %40 = dma.done [#allocation5], 256
    $region17: #{tpu_custom_call.1} parent=1 // pred_fallthru
      _
    %p41 = scmp.eq.s32.totalorder 0, 0
    // Predicated region
    $region18: #{tpu_custom_call.1} parent=1 // pred_check
      %p42 = pneg %p41
    $region19: #{tpu_custom_call.1} parent=1 // pred_check_branch
      %44 = sbr.rel (%p42) target = $region21
    $region20: #{tpu_custom_call.1} parent=1 // pred_region
      %vm45 = vcmask 7168
      %46 = vst.msk [vmem:[%s2] sm:$0xff] %vm45, 0.0
      %47 = vst.msk [vmem:[%s3] sm:$0xff] %vm45, 0.0
    $region21: #{tpu_custom_call.1} parent=1 // pred_fallthru
      _
    %v48 = vld [vmem:[#allocation2] sm:$0xff]
    %v49 = vld [vmem:[#allocation2 + $0x8] sm:$0xff]
    %v50 = vld [vmem:[#allocation4] sm:$0xff]
    %v51 = vld [vmem:[#allocation4 + $0x8] sm:$0xff]
    %v52 = vmul.f32 %v48, 0.5
    %v53 = vmul.f32 %v49, 0.5
    %v54 = vtanh.pop %v52
    %v55 = vtanh.pop %v53
    %v56 = vmul.f32 %v54, 0.5
    %v57 = vmul.f32 %v55, 0.5
    %v58 = vadd.f32 %v56, 0.5
    %v59 = vadd.f32 %v57, 0.5
    %v60 = vld [vmem:[%s2] sm:$0xff]
    %v61 = vmul.f32 %v58, %v50
    %v62 = vmul.f32 %v59, %v51
    %v63 = vadd.f32 %v61, %v62
    %64 = vadd.xlane.f32.xlu0 %v63
    %v65 = vpop.xlane.xlu0 %64
    %v66 = vadd.f32 %v60, %v65
    %vm67 = vcmask 7168
    %68 = vst.msk [vmem:[%s2] sm:$0xff] %vm67, %v66
    %v69 = vld [vmem:[%s3] sm:$0xff]
    %v70 = vadd.f32 %v58, %v50
    %v71 = vadd.f32 %v59, %v51
    %v72 = vadd.f32 %v70, %v71
    %73 = vadd.xlane.f32.xlu0 %v72
    %v74 = vpop.xlane.xlu0 %73
    %v75 = vadd.f32 %v69, %v74
    %76 = vst.msk [vmem:[%s3] sm:$0xff] %vm67, %v75
    // Predicated region
    $region22: #{tpu_custom_call.1} parent=1 // pred_check
      _
    $region23: #{tpu_custom_call.1} parent=1 // pred_check_branch
      %78 = sbr.rel (0) target = $region25
    $region24: #{tpu_custom_call.1} parent=1 // pred_region
      _
    $region25: #{tpu_custom_call.1} parent=1 // pred_fallthru
      _
    // Predicated region
    $region26: #{tpu_custom_call.1} parent=1 // pred_check
      _
    $region27: #{tpu_custom_call.1} parent=1 // pred_check_branch
      %80 = sbr.rel (0) target = $region29
    $region28: #{tpu_custom_call.1} parent=1 // pred_region
      _
    $region29: #{tpu_custom_call.1} parent=1 // pred_fallthru
      _
    // Predicated region
    $region30: #{tpu_custom_call.1} parent=1 // pred_check
      _
    $region31: #{tpu_custom_call.1} parent=1 // pred_check_branch
      %82 = sbr.rel (0) target = $region33
    $region32: #{tpu_custom_call.1} parent=1 // pred_region
      _
    $region33: #{tpu_custom_call.1} parent=1 // pred_fallthru
      _
    // Predicated region
    $region34: #{tpu_custom_call.1} parent=1 // pred_check
      _
    $region35: #{tpu_custom_call.1} parent=1 // pred_check_branch
      %84 = sbr.rel (0) target = $region37
    $region36: #{tpu_custom_call.1} parent=1 // pred_region
      _
    $region37: #{tpu_custom_call.1} parent=1 // pred_fallthru
      _
    %85 = vsyncpa [#allocation3], 1
    %86 = vsyncpa [#allocation5], 1

</llo_original>
